<compile_context>
chip_gen: v6e
topology: v6e:2x2x1
jax: 0.10.0
libtpu: 0.0.40
codegen_flags: <defaults>
</compile_context>

<pallas_src>
import functools

import numpy as np
import jax
import jax.numpy as jnp
from jax.experimental import pallas as pl
from jax.experimental.pallas import tpu as pltpu


# ----------------------------------------------------------------------------
# Parameter / buffer setup (mirrors PositionalEncoding.__init__)
# ----------------------------------------------------------------------------
def make_positional_table(num_hiddens: int, max_len: int = 1500) -> jnp.ndarray:
    """Deterministic sin/cos positional table, identical to the PyTorch init."""
    P = np.zeros((1, max_len, num_hiddens), dtype=np.float32)
    pos = np.arange(max_len, dtype=np.float32).reshape(-1, 1)
    X = pos / np.power(
        10000.0, np.arange(0, num_hiddens, 2, dtype=np.float32) / num_hiddens
    )
    P[:, :, 0::2] = np.sin(X)[:, : P[:, :, 0::2].shape[-1]]
    P[:, :, 1::2] = np.cos(X)[:, : P[:, :, 1::2].shape[-1]]
    return jnp.asarray(P)


# ----------------------------------------------------------------------------
# Pallas kernel: lane-dense broadcast add of the positional encoding
# ----------------------------------------------------------------------------
def _pe_add_kernel(x_ref, p_ref, o_ref):
    # x_ref: (TILE_B, TILE_C) row/col block of the input
    # p_ref: (1, TILE_C)      positional slice (block index constant over rows)
    # Dropout with p=0.0 is the identity, so forward == x + P (broadcast over rows).
    o_ref[...] = x_ref[...] + p_ref[...]


# ----------------------------------------------------------------------------
# Tiling heuristics
# ----------------------------------------------------------------------------
def _pick_target_block_bytes() -> int:
    """Per-generation block-byte target (bigger on faster-HBM / bigger-VMEM chips)."""
    try:
        info = pltpu.get_tpu_info()
        vmem = getattr(info, "vmem_capacity_bytes", None)
        if vmem is not None and vmem <= (64 << 20):
            return 6 << 20  # v7x: ~3.2 TB/s HBM but only 64 MiB VMEM per TC
        return 8 << 20      # v5e / v6e: 128 MiB physical VMEM
    except Exception:
        return 4 << 20      # safe fallback


def _choose_tiles(B: int, cols: int, itemsize: int, target_bytes: int):
    """Pick (tile_b, tile_cols) for a (B, cols) lane-dense add."""
    sub = max(8, 32 // itemsize)          # dtype sublane packing multiple
    row_bytes = cols * itemsize

    # Even the minimum legal row tile would be a huge block -> tile the cols too.
    if sub * row_bytes > target_bytes and cols > 128:
        tile_b = B if B < sub else sub
        tile_cols = max(128, (target_bytes // max(1, tile_b * itemsize)) // 128 * 128)
        tile_cols = min(tile_cols, cols)
        if cols % 128 == 0:
            # Prefer a divisor of cols so every block store is full-width.
            while cols % tile_cols != 0:
                tile_cols -= 128
        return tile_b, tile_cols

    # Row-only tiling (cols stays the full, lane-dense extent).
    tile_cols = cols
    tile_b = max(1, target_bytes // max(1, row_bytes))
    if tile_b >= B:
        tile_b = B
        # Megacore / pipelining: prefer >=2 row blocks when a legal split exists.
        if B >= 2 * sub:
            tile_b = max(sub, ((B + 1) // 2) // sub * sub)
    else:
        tile_b = max(sub, (tile_b // sub) * sub)
        tile_b = min(tile_b, B)
    return tile_b, tile_cols


# ----------------------------------------------------------------------------
# Wrapper (jitted so the P slice / cast fuse into one dispatch with the kernel)
# ----------------------------------------------------------------------------
@functools.partial(jax.jit, static_argnames=("block_target_bytes",))
def positional_encoding(x: jnp.ndarray, P: jnp.ndarray,
                        block_target_bytes: int | None = None) -> jnp.ndarray:
    """forward(X) = dropout(X + P[:, :X.shape[1], :]) with dropout p = 0.0."""
    B, S, H = x.shape
    if S > P.shape[1]:
        raise ValueError(
            f"sequence length {S} exceeds positional table max_len {P.shape[1]}")
    if H != P.shape[2]:
        raise ValueError(f"hidden size mismatch: x has {H}, P has {P.shape[2]}")

    cols = S * H
    itemsize = jnp.dtype(x.dtype).itemsize

    # Lane-dense 2D views (free reshapes of contiguous data).
    x2 = x.reshape(B, cols)
    p2 = P[:, :S, :].reshape(1, cols).astype(x.dtype)

    target = block_target_bytes if block_target_bytes else _pick_target_block_bytes()
    tile_b, tile_cols = _choose_tiles(B, cols, itemsize, target)

    n_col = pl.cdiv(cols, tile_cols)
    n_row = pl.cdiv(B, tile_b)
    # Column axis OUTER, row axis INNER: P's block index is constant across the
    # inner sweep, so it stays VMEM-resident between row blocks.
    grid = (n_col, n_row)

    # Explicit scoped-VMEM budget: double-buffered x & out blocks + P slice.
    block_bytes = tile_b * tile_cols * itemsize
    p_bytes = tile_cols * itemsize
    needed = 4 * block_bytes + 2 * p_bytes
    vmem_limit = int(min(max(needed + needed // 4 + (1 << 20), 16 << 20), 48 << 20))

    out2 = pl.pallas_call(
        _pe_add_kernel,
        out_shape=jax.ShapeDtypeStruct((B, cols), x.dtype),
        grid_spec=pl.GridSpec(
            grid=grid,
            in_specs=[
                pl.BlockSpec((tile_b, tile_cols), lambda j, i: (i, j)),  # x block
                pl.BlockSpec((1, tile_cols), lambda j, i: (0, j)),       # P slice
            ],
            out_specs=pl.BlockSpec((tile_b, tile_cols), lambda j, i: (i, j)),
        ),
        compiler_params=pltpu.CompilerParams(
            dimension_semantics=("parallel", "parallel"),
            vmem_limit_bytes=vmem_limit,
        ),
    )(x2, p2)

    return out2.reshape(B, S, H)


# ----------------------------------------------------------------------------
# Main
# ----------------------------------------------------------------------------
if __name__ == "__main__":
    BATCH = 2
    SEQ = 8
    NUM_HIDDENS = 32
    MAX_LEN = 1500

    key = jax.random.PRNGKey(0)
    x = jax.random.normal(key, (BATCH, SEQ, NUM_HIDDENS), dtype=jnp.float32)
    P = make_positional_table(NUM_HIDDENS, MAX_LEN)

    out = jax.block_until_ready(positional_encoding(x, P))
    ref = x + P[:, :SEQ, :]
    np.testing.assert_allclose(np.asarray(out), np.asarray(ref), rtol=1e-6, atol=1e-6)

    # Exercise the two-level (row, col) tiling + multi-block grid path at a
    # small size by forcing a tiny per-block byte target.
    x_big = jax.random.normal(jax.random.PRNGKey(0), (16, 16, 128), dtype=jnp.float32)
    P_big = make_positional_table(128, 64)
    out_big = jax.block_until_ready(
        positional_encoding(x_big, P_big, block_target_bytes=32 * 1024))
    ref_big = x_big + P_big[:, :16, :]
    np.testing.assert_allclose(np.asarray(out_big), np.asarray(ref_big),
                               rtol=1e-6, atol=1e-6)

    print("KERNEL_OK")
</pallas_src>

<mosaic_0001>
module attributes {stable_mosaic.version = 11 : i64} {
  func.func @_pe_add_kernel(%arg0: i32, %arg1: i32, %arg2: memref<2x256xf32, #tpu.memory_space<vmem>>, %arg3: memref<1x256xf32, #tpu.memory_space<vmem>>, %arg4: memref<2x256xf32, #tpu.memory_space<vmem>>) attributes {dimension_semantics = [#tpu.dimension_semantics<parallel>, #tpu.dimension_semantics<parallel>], iteration_bounds = array<i64: 1, 1>, scalar_prefetch = 0 : i64, scratch_operands = 0 : i64, tpu.core_type = #tpu.core_type<tc>, window_params = [{transform_indices = @transform_0, window_bounds = array<i64: 2, 256>}, {transform_indices = @transform_1, window_bounds = array<i64: 1, 256>}, {transform_indices = @transform_2, window_bounds = array<i64: 2, 256>}]} {
    %c0 = arith.constant 0 : index
    %c0_0 = arith.constant 0 : index
    %0 = vector.load %arg2[%c0, %c0_0] : memref<2x256xf32, #tpu.memory_space<vmem>>, vector<2x256xf32>
    %c0_1 = arith.constant 0 : index
    %c0_2 = arith.constant 0 : index
    %1 = vector.load %arg3[%c0_1, %c0_2] : memref<1x256xf32, #tpu.memory_space<vmem>>, vector<1x256xf32>
    %2 = vector.broadcast %1 : vector<1x256xf32> to vector<2x256xf32>
    %3 = arith.addf %0, %2 : vector<2x256xf32>
    %c0_3 = arith.constant 0 : index
    %c0_4 = arith.constant 0 : index
    %4 = vector.load %arg4[%c0_3, %c0_4] : memref<2x256xf32, #tpu.memory_space<vmem>>, vector<2x256xf32>
    tpu.vector_store %arg4[%c0_3, %c0_4], %3 {strides = array<i32>} : memref<2x256xf32, #tpu.memory_space<vmem>>, vector<2x256xf32>,
    return
  }
  func.func @transform_0(%arg0: i32, %arg1: i32) -> (i32, i32) {
    %c0_i32 = arith.constant 0 : i32
    return %arg1, %arg0 : i32, i32
  }
  func.func @transform_1(%arg0: i32, %arg1: i32) -> (i32, i32) {
    %c0_i32 = arith.constant 0 : i32
    %c0_i32_0 = arith.constant 0 : i32
    return %c0_i32, %arg0 : i32, i32
  }
  func.func @transform_2(%arg0: i32, %arg1: i32) -> (i32, i32) {
    %c0_i32 = arith.constant 0 : i32
    return %arg1, %arg0 : i32, i32
  }
}

</mosaic_0001>

<llo_original>
// kernel: positional_encoding.1
$region0: #{positional_encoding.1}
  #allocation0 [shape = 'u32[]', space=smem, size = 0x4, offset = 0x4, fixed_abs, tag = 'smem constant byte address 0x4 - core index']
  #allocation1 [shape = 'u32[144,128]{1,0:T(1,128)}', space=vmem, size = 0x12000, scoped, tag = 'internal scratch']
  %s0 = inlined_call_operand.vmem [shape: f32[2,256], index: 0, kind: input, shape index: {}]
  %s1 = inlined_call_operand.vmem [shape: f32[1,256], index: 1, kind: input, shape index: {}]
  %s2 = inlined_call_operand.vmem [shape: f32[2,256], index: 2, kind: output, shape index: {}]
  %s3 = sld [smem:[#allocation0]]
  $region18: #{positional_encoding.1} parent=0
    _
  %s5 = ssub.s32 1, %s3
  %s6 = scalar_select 0, %s5, %s3
  // Predicated region
  $region2: #{positional_encoding.1} parent=0 // pred_check
    _
  $region3: #{positional_encoding.1} parent=0 // pred_check_branch
    %8 = sbr.rel (0) target = $region5
  $region4: #{positional_encoding.1} parent=0 // pred_region
    _
  $region5: #{positional_encoding.1} parent=0 // pred_fallthru
    _
  // Predicated region
  $region6: #{positional_encoding.1} parent=0 // pred_check
    _
  $region7: #{positional_encoding.1} parent=0 // pred_check_branch
    %10 = sbr.rel (0) target = $region9
  $region8: #{positional_encoding.1} parent=0 // pred_region
    _
  $region9: #{positional_encoding.1} parent=0 // pred_fallthru
    _
  %v11 = vld [vmem:[%s0] sm:$0xf]
  %v12 = vld [vmem:[%s1] sm:$0x3]
  %v14 = vlaneseq
  %v15 = vshrl.u32 %v14, 7
  %v16 = vsub.s32 0, %v15
  %v17 = vrot.slane %v12, %v16
  %v18 = vlaneseq
  %v19 = vshrl.u32 %v18, 7
  %v20 = vsub.s32 1, %v19
  %v21 = vrot.slane %v12, %v20
  %v22 = vcombine.low %v17, %v21
  %v24 = vunpack.c.l.s4 1983009808
  %v25 = vunpack.c.0.s8 %v24
  %v26 = vlaneseq
  %v27 = vshrl.u32 %v26, 7
  %v28 = vsub.s32 %v25, %v27
  %v29 = vrot.slane %v22, %v28
  %v31 = vadd.f32 %v11, %v29
  %32 = vst [vmem:[%s2] sm:$0xf] %v31
  // Predicated region
  $region10: #{positional_encoding.1} parent=0 // pred_check
    _
  $region11: #{positional_encoding.1} parent=0 // pred_check_branch
    %34 = sbr.rel (0) target = $region13
  $region12: #{positional_encoding.1} parent=0 // pred_region
    _
  $region13: #{positional_encoding.1} parent=0 // pred_fallthru
    _
  // Predicated region
  $region14: #{positional_encoding.1} parent=0 // pred_check
    _
  $region15: #{positional_encoding.1} parent=0 // pred_check_branch
    %36 = sbr.rel (0) target = $region17
  $region16: #{positional_encoding.1} parent=0 // pred_region
    _
  $region17: #{positional_encoding.1} parent=0 // pred_fallthru
    _

</llo_original>
